<compile_context>
chip_gen: v5e
topology: v5e:2x2
jax: 0.10.0
libtpu: 0.0.40
codegen_flags: <defaults>
</compile_context>

<pallas_src>
import jax
import jax.numpy as jnp
from jax import lax
from jax.experimental import pallas as pl
from jax.experimental.pallas import tpu as pltpu  # noqa: F401  (TPU backend assumed)

# Problem sizes (small, consistent with the module's forward signature)
B, CIN, L = 2, 4, 16           # batch, in_channels, seq_len
COUT, K, S = 8, 3, 2           # num_filters, filter_length, subsample_length
P = (K - 1) // 2               # "same"-style padding used by Conv_Bn_Activation
LOUT = (L + 2 * P - K) // S + 1
M = B * LOUT                   # flattened (batch, out_position) rows
EPS = 1e-5


def resnet_block_kernel(patches_ref, wbig_ref, b1sc_ref, w2all_ref, b2_ref,
                        sdown_ref, sup_ref, o_ref):
    # patches_ref : (M, K*CIN)       conv1 im2col patches, whole batch
    # wbig_ref    : (K*CIN, 2*COUT)  [conv1 * BN1_scale | 1x1 shortcut * BNsc_scale]
    # b1sc_ref    : (1, 2*COUT)      [BN1 bias | BNsc bias]
    # w2all_ref   : (COUT, K*COUT)   conv2 per-tap weights * BN2_scale, taps in lanes
    # b2_ref      : (1, COUT)        BN2 bias
    # sdown_ref   : (M, M)           constant shift matrix: row r selects row r-1 (same batch)
    # sup_ref     : (M, M)           constant shift matrix: row r selects row r+1 (same batch)
    # o_ref       : (M, COUT)

    patches = patches_ref[...]

    # ---- conv1 (stride S) + 1x1 shortcut (stride S): one MXU push ----
    z = jnp.dot(patches, wbig_ref[...], preferred_element_type=jnp.float32)
    z = z + b1sc_ref[...]
    y1 = jnp.maximum(z[:, :COUT], 0.0)        # BN1 (folded) + ReLU
    sc = z[:, COUT:]                          # shortcut BN (folded), no activation

    # ---- conv2 (stride 1, "same" padding): one push for all K tap products,
    #      then the +-1 row shifts as matmuls with constant 0/1 matrices
    #      (no in-kernel pad copy, no strided sublane traffic; MXU is idle) ----
    t = jnp.dot(y1, w2all_ref[...], preferred_element_type=jnp.float32)   # (M, K*COUT)
    y2 = (jnp.dot(sdown_ref[...], t[:, :COUT], preferred_element_type=jnp.float32)
          + t[:, COUT:2 * COUT]
          + jnp.dot(sup_ref[...], t[:, 2 * COUT:], preferred_element_type=jnp.float32)
          + b2_ref[...])

    # ---- residual add + out activation (ReLU); out_dropout is Identity ----
    o_ref[...] = jnp.maximum(y2 + sc, 0.0).astype(o_ref.dtype)


def fold_bn(gamma, beta, mean, var):
    """Inference-mode BatchNorm1d folded into per-channel scale/bias."""
    scale = gamma / jnp.sqrt(var + EPS)
    bias = beta - mean * scale
    return scale.astype(jnp.float32), bias.astype(jnp.float32)


@jax.jit
def resnet_basic_block(x_ncl, w1, bn1, w2, bn2, wsc, bnsc):
    """x_ncl: (B, CIN, L) float32 (PyTorch NCL). Returns (B, COUT, LOUT)."""
    s1, b1 = fold_bn(*bn1)
    s2, b2 = fold_bn(*bn2)
    ss, bs = fold_bn(*bnsc)

    # ---- input prep: NCL -> (B, L, C), pad, im2col for the strided conv ----
    x_blc = jnp.transpose(x_ncl, (0, 2, 1))
    x_pad = jnp.pad(x_blc, ((0, 0), (P, P), (0, 0)))
    cols = [x_pad[:, k:k + (LOUT - 1) * S + 1:S, :] for k in range(K)]   # each (B, LOUT, CIN)
    patches = jnp.concatenate(cols, axis=-1).reshape(M, K * CIN)         # (M, K*CIN)

    # ---- weight prep: fold BN scales, fuse conv1 + shortcut ----
    # PyTorch conv weight (Cout, Cin, K) -> (K, Cin, Cout), scale folded on Cout.
    w1_flat = (jnp.transpose(w1, (2, 1, 0)) * s1[None, None, :]).reshape(K * CIN, COUT)
    wsc_ic = jnp.transpose(wsc[:, :, 0], (1, 0)) * ss[None, :]           # (CIN, COUT)
    w_big = jnp.zeros((K * CIN, 2 * COUT), jnp.float32)
    w_big = w_big.at[:, :COUT].set(w1_flat)
    # center tap of the padded patch is x_pad[j*S + P] == x[j*S] -> 1x1 shortcut input
    w_big = w_big.at[P * CIN:(P + 1) * CIN, COUT:].set(wsc_ic)
    b1sc = jnp.concatenate([b1, bs])[None, :]                            # (1, 2*COUT)

    w2_kic = jnp.transpose(w2, (2, 1, 0)) * s2[None, None, :]            # (K, COUT, COUT)
    w2all = jnp.concatenate([w2_kic[k] for k in range(K)], axis=1)       # (COUT, K*COUT)
    b2_row = b2[None, :]                                                 # (1, COUT)

    # ---- constant shift matrices for conv2's +-1 taps (batch-boundary aware) ----
    r = jnp.arange(M)
    sdown = ((r[:, None] - 1 == r[None, :]) &
             (r[:, None] % LOUT != 0)).astype(jnp.float32)               # picks row r-1
    sup = ((r[:, None] + 1 == r[None, :]) &
           (r[:, None] % LOUT != LOUT - 1)).astype(jnp.float32)          # picks row r+1

    # Single kernel invocation, no grid: every operand lands whole in VMEM
    # (total footprint is a few KB).
    out_flat = pl.pallas_call(
        resnet_block_kernel,
        out_shape=jax.ShapeDtypeStruct((M, COUT), jnp.float32),
    )(patches, w_big, b1sc, w2all, b2_row, sdown, sup)

    return jnp.transpose(out_flat.reshape(B, LOUT, COUT), (0, 2, 1))     # back to NCL


def ref_forward(x_ncl, raw):
    """Plain-JAX reference (same inference semantics) for verification."""
    w1, (g1, b1, m1, v1), w2, (g2, b2, m2, v2), wsc, (gs, bs, ms, vs) = raw

    def bn(y, g, b, m, v):
        return (y - m[None, :, None]) / jnp.sqrt(v + EPS)[None, :, None] \
            * g[None, :, None] + b[None, :, None]

    dn = ("NCH", "OIH", "NCH")
    y = lax.conv_general_dilated(x_ncl, w1, (S,), [(P, P)], dimension_numbers=dn)
    y = jnp.maximum(bn(y, g1, b1, m1, v1), 0.0)
    y = lax.conv_general_dilated(y, w2, (1,), [(P, P)], dimension_numbers=dn)
    y = bn(y, g2, b2, m2, v2)
    sc = lax.conv_general_dilated(x_ncl, wsc, (S,), [(0, 0)], dimension_numbers=dn)
    sc = bn(sc, gs, bs, ms, vs)
    return jnp.maximum(y + sc, 0.0)


if __name__ == "__main__":
    key = jax.random.PRNGKey(0)
    keys = jax.random.split(key, 16)

    x = jax.random.normal(keys[0], (B, CIN, L), jnp.float32)

    # Deterministic synthetic parameters (module __init__ shapes; bias=False).
    # TODO(synk): 'he_normal' kernel_initializer replaced by a plain scaled normal init.
    w1 = jax.random.normal(keys[1], (COUT, CIN, K), jnp.float32) * 0.3
    w2 = jax.random.normal(keys[2], (COUT, COUT, K), jnp.float32) * 0.3
    wsc = jax.random.normal(keys[3], (COUT, CIN, 1), jnp.float32) * 0.3

    def bn_params(kg, kb, km, kv, c):
        g = 1.0 + 0.1 * jax.random.normal(kg, (c,), jnp.float32)
        b = 0.1 * jax.random.normal(kb, (c,), jnp.float32)
        m = 0.1 * jax.random.normal(km, (c,), jnp.float32)
        v = 0.5 + jnp.abs(jax.random.normal(kv, (c,), jnp.float32))
        return g, b, m, v

    bn1 = bn_params(keys[4], keys[5], keys[6], keys[7], COUT)
    bn2 = bn_params(keys[8], keys[9], keys[10], keys[11], COUT)
    bns = bn_params(keys[12], keys[13], keys[14], keys[15], COUT)

    # TODO(synk): attn (SE/GC/non-local), groups>1, dropout>0 and training-mode
    # BatchNorm statistics are not covered by this inference-mode kernel.
    out = resnet_basic_block(x, w1, bn1, w2, bn2, wsc, bns)
    out = jax.block_until_ready(out)

    ref = ref_forward(x, (w1, bn1, w2, bn2, wsc, bns))
    assert out.shape == (B, COUT, LOUT), out.shape
    # tolerance allows for MXU f32 rounding differences vs the XLA conv reference
    assert jnp.allclose(out, ref, atol=2e-3, rtol=2e-3), \
        float(jnp.max(jnp.abs(out - ref)))

    print("KERNEL_OK")
</pallas_src>

<mosaic_0001>
module attributes {stable_mosaic.version = 11 : i64} {
  func.func @resnet_block_kernel(%arg0: memref<16x12xf32, #tpu.memory_space<vmem>>, %arg1: memref<12x16xf32, #tpu.memory_space<vmem>>, %arg2: memref<1x16xf32, #tpu.memory_space<vmem>>, %arg3: memref<8x24xf32, #tpu.memory_space<vmem>>, %arg4: memref<1x8xf32, #tpu.memory_space<vmem>>, %arg5: memref<16x16xf32, #tpu.memory_space<vmem>>, %arg6: memref<16x16xf32, #tpu.memory_space<vmem>>, %arg7: memref<16x8xf32, #tpu.memory_space<vmem>>) attributes {dimension_semantics = [], scalar_prefetch = 0 : i64, scratch_operands = 0 : i64, tpu.core_type = #tpu.core_type<tc>} {
    %c0 = arith.constant 0 : index
    %c0_0 = arith.constant 0 : index
    %0 = vector.load %arg0[%c0, %c0_0] : memref<16x12xf32, #tpu.memory_space<vmem>>, vector<16x12xf32>
    %c0_1 = arith.constant 0 : index
    %c0_2 = arith.constant 0 : index
    %1 = vector.load %arg1[%c0_1, %c0_2] : memref<12x16xf32, #tpu.memory_space<vmem>>, vector<12x16xf32>
    %cst = arith.constant dense<0.000000e+00> : vector<16x16xf32>
    %2 = tpu.matmul %0, %1, %cst {dimension_numbers = #tpu.dot_dimension_numbers<[1], [0], [0], [1], [0, 0, 1, 1], [], []>} : vector<16x12xf32>, vector<12x16xf32>, vector<16x16xf32> -> vector<16x16xf32>
    %c0_3 = arith.constant 0 : index
    %c0_4 = arith.constant 0 : index
    %3 = vector.load %arg2[%c0_3, %c0_4] : memref<1x16xf32, #tpu.memory_space<vmem>>, vector<1x16xf32>
    %4 = vector.broadcast %3 : vector<1x16xf32> to vector<16x16xf32>
    %5 = arith.addf %2, %4 : vector<16x16xf32>
    %6 = vector.extract_strided_slice %5 {offsets = [0, 0], sizes = [16, 8], strides = [1, 1]} : vector<16x16xf32> to vector<16x8xf32>
    %cst_5 = arith.constant 0.000000e+00 : f32
    %7 = vector.broadcast %cst_5 : f32 to vector<16x8xf32>
    %8 = arith.maximumf %6, %7 : vector<16x8xf32>
    %9 = vector.extract_strided_slice %5 {offsets = [0, 8], sizes = [16, 8], strides = [1, 1]} : vector<16x16xf32> to vector<16x8xf32>
    %c0_6 = arith.constant 0 : index
    %c0_7 = arith.constant 0 : index
    %10 = vector.load %arg3[%c0_6, %c0_7] : memref<8x24xf32, #tpu.memory_space<vmem>>, vector<8x24xf32>
    %cst_8 = arith.constant dense<0.000000e+00> : vector<16x24xf32>
    %11 = tpu.matmul %8, %10, %cst_8 {dimension_numbers = #tpu.dot_dimension_numbers<[1], [0], [0], [1], [0, 0, 1, 1], [], []>} : vector<16x8xf32>, vector<8x24xf32>, vector<16x24xf32> -> vector<16x24xf32>
    %c0_9 = arith.constant 0 : index
    %c0_10 = arith.constant 0 : index
    %12 = vector.load %arg5[%c0_9, %c0_10] : memref<16x16xf32, #tpu.memory_space<vmem>>, vector<16x16xf32>
    %13 = vector.extract_strided_slice %11 {offsets = [0, 0], sizes = [16, 8], strides = [1, 1]} : vector<16x24xf32> to vector<16x8xf32>
    %cst_11 = arith.constant dense<0.000000e+00> : vector<16x8xf32>
    %14 = tpu.matmul %12, %13, %cst_11 {dimension_numbers = #tpu.dot_dimension_numbers<[1], [0], [0], [1], [0, 0, 1, 1], [], []>} : vector<16x16xf32>, vector<16x8xf32>, vector<16x8xf32> -> vector<16x8xf32>
    %15 = vector.extract_strided_slice %11 {offsets = [0, 8], sizes = [16, 8], strides = [1, 1]} : vector<16x24xf32> to vector<16x8xf32>
    %16 = arith.addf %14, %15 : vector<16x8xf32>
    %c0_12 = arith.constant 0 : index
    %c0_13 = arith.constant 0 : index
    %17 = vector.load %arg6[%c0_12, %c0_13] : memref<16x16xf32, #tpu.memory_space<vmem>>, vector<16x16xf32>
    %18 = vector.extract_strided_slice %11 {offsets = [0, 16], sizes = [16, 8], strides = [1, 1]} : vector<16x24xf32> to vector<16x8xf32>
    %cst_14 = arith.constant dense<0.000000e+00> : vector<16x8xf32>
    %19 = tpu.matmul %17, %18, %cst_14 {dimension_numbers = #tpu.dot_dimension_numbers<[1], [0], [0], [1], [0, 0, 1, 1], [], []>} : vector<16x16xf32>, vector<16x8xf32>, vector<16x8xf32> -> vector<16x8xf32>
    %20 = arith.addf %16, %19 : vector<16x8xf32>
    %c0_15 = arith.constant 0 : index
    %c0_16 = arith.constant 0 : index
    %21 = vector.load %arg4[%c0_15, %c0_16] : memref<1x8xf32, #tpu.memory_space<vmem>>, vector<1x8xf32>
    %22 = vector.broadcast %21 : vector<1x8xf32> to vector<16x8xf32>
    %23 = arith.addf %20, %22 : vector<16x8xf32>
    %24 = arith.addf %23, %9 : vector<16x8xf32>
    %cst_17 = arith.constant 0.000000e+00 : f32
    %25 = vector.broadcast %cst_17 : f32 to vector<16x8xf32>
    %26 = arith.maximumf %24, %25 : vector<16x8xf32>
    %c0_18 = arith.constant 0 : index
    %c0_19 = arith.constant 0 : index
    %27 = vector.load %arg7[%c0_18, %c0_19] : memref<16x8xf32, #tpu.memory_space<vmem>>, vector<16x8xf32>
    tpu.vector_store %arg7[%c0_18, %c0_19], %26 {strides = array<i32>} : memref<16x8xf32, #tpu.memory_space<vmem>>, vector<16x8xf32>,
    return
  }
}

</mosaic_0001>

<llo_original>
// kernel: resnet_basic_block.1
$region0: #{resnet_basic_block.1}
  #allocation0 [shape = 'u32[]', space=smem, size = 0x4, offset = 0x4, fixed_abs, tag = 'smem constant byte address 0x4 - core index']
  #allocation1 [shape = 'u32[72,128]{1,0:T(1,128)}', space=vmem, size = 0x9000, scoped, tag = 'internal scratch']
  %s0 = inlined_call_operand.vmem [shape: f32[16,12], index: 0, kind: input, shape index: {}]
  %s1 = inlined_call_operand.vmem [shape: f32[12,16], index: 1, kind: input, shape index: {}]
  %s2 = inlined_call_operand.vmem [shape: f32[1,16], index: 2, kind: input, shape index: {}]
  %s3 = inlined_call_operand.vmem [shape: f32[8,24], index: 3, kind: input, shape index: {}]
  %s4 = inlined_call_operand.vmem [shape: f32[1,8], index: 4, kind: input, shape index: {}]
  %s5 = inlined_call_operand.vmem [shape: f32[16,16], index: 5, kind: input, shape index: {}]
  %s6 = inlined_call_operand.vmem [shape: f32[16,16], index: 6, kind: input, shape index: {}]
  %s7 = inlined_call_operand.vmem [shape: f32[16,8], index: 7, kind: output, shape index: {}]
  %s8 = sld [smem:[#allocation0]]
  $region38: #{resnet_basic_block.1} parent=0
    _
  %s10 = ssub.s32 1, %s8
  %s11 = scalar_select 0, %s10, %s8
  // Predicated region
  $region2: #{resnet_basic_block.1} parent=0 // pred_check
    _
  $region3: #{resnet_basic_block.1} parent=0 // pred_check_branch
    %13 = sbr.rel (0) target = $region5
  $region4: #{resnet_basic_block.1} parent=0 // pred_region
    _
  $region5: #{resnet_basic_block.1} parent=0 // pred_fallthru
    _
  // Predicated region
  $region6: #{resnet_basic_block.1} parent=0 // pred_check
    _
  $region7: #{resnet_basic_block.1} parent=0 // pred_check_branch
    %15 = sbr.rel (0) target = $region9
  $region8: #{resnet_basic_block.1} parent=0 // pred_region
    _
  $region9: #{resnet_basic_block.1} parent=0 // pred_fallthru
    _
  // Predicated region
  $region10: #{resnet_basic_block.1} parent=0 // pred_check
    _
  $region11: #{resnet_basic_block.1} parent=0 // pred_check_branch
    %17 = sbr.rel (0) target = $region13
  $region12: #{resnet_basic_block.1} parent=0 // pred_region
    _
  $region13: #{resnet_basic_block.1} parent=0 // pred_fallthru
    _
  // Predicated region
  $region14: #{resnet_basic_block.1} parent=0 // pred_check
    _
  $region15: #{resnet_basic_block.1} parent=0 // pred_check_branch
    %19 = sbr.rel (0) target = $region17
  $region16: #{resnet_basic_block.1} parent=0 // pred_region
    _
  $region17: #{resnet_basic_block.1} parent=0 // pred_fallthru
    _
  // Predicated region
  $region18: #{resnet_basic_block.1} parent=0 // pred_check
    _
  $region19: #{resnet_basic_block.1} parent=0 // pred_check_branch
    %21 = sbr.rel (0) target = $region21
  $region20: #{resnet_basic_block.1} parent=0 // pred_region
    _
  $region21: #{resnet_basic_block.1} parent=0 // pred_fallthru
    _
  // Predicated region
  $region22: #{resnet_basic_block.1} parent=0 // pred_check
    _
  $region23: #{resnet_basic_block.1} parent=0 // pred_check_branch
    %23 = sbr.rel (0) target = $region25
  $region24: #{resnet_basic_block.1} parent=0 // pred_region
    _
  $region25: #{resnet_basic_block.1} parent=0 // pred_fallthru
    _
  // Predicated region
  $region26: #{resnet_basic_block.1} parent=0 // pred_check
    _
  $region27: #{resnet_basic_block.1} parent=0 // pred_check_branch
    %25 = sbr.rel (0) target = $region29
  $region28: #{resnet_basic_block.1} parent=0 // pred_region
    _
  $region29: #{resnet_basic_block.1} parent=0 // pred_fallthru
    _
  %v26 = vld [vmem:[%s0] sm:$0xff]
  %v27 = vld [vmem:[%s0 + $0x8] sm:$0xff]
  %v28 = vld [vmem:[%s1] sm:$0xff]
  %v29 = vld [vmem:[%s1 + $0x8] sm:$0xf]
  %v30 = vld [vmem:[%s2] sm:$0x1]
  %v32 = vperm.slane %v30, 0
  %vm34 = vcmask 97280
  %v36 = vsel %vm34, %v26, 0
  %v39 = vsel %vm34, %v27, 0
  %vm41 = vcmask 1043456
  %v43 = vsel %vm41, %v29, 0
  %45 = vmatpush.msra.mxu0 0.0
  %46 = vmatpush.msra.mxu0 0.0
  %47 = vmatpush.msra.mxu0 0.0
  %48 = vmatpush.msra.mxu0 0.0
  %49 = vmatpush.msra.mxu0 0.0
  %50 = vmatpush.msra.mxu0 0.0
  %51 = vmatpush.msra.mxu0 0.0
  %52 = vmatpush.msra.mxu0 0.0
  %53 = vmatpush.msra.mxu0 0.0
  %54 = vmatpush.msra.mxu0 0.0
  %55 = vmatpush.msra.mxu0 0.0
  %56 = vmatpush.msra.mxu0 0.0
  %57 = vmatpush.msra.mxu0 0.0
  %58 = vmatpush.msra.mxu0 0.0
  %59 = vmatpush.msra.mxu0 %v43
  %60 = vmatpush.msra.mxu0 %v28
  %61 = vmatmul.f32.gmra.mxu0 %v36
  %v62 = vpop.f32.mrf.mxu0
  %v63 = vadd.f32 %v32, %v62
  %64 = vmatmul.f32.gmra.mxu0 %v39
  %v65 = vpop.f32.mrf.mxu0
  %v66 = vadd.f32 %v32, %v65
  %67 = vdwg.mxu0
  %v68 = vmax.f32 %v63, 0.0
  %v69 = vmax.f32 %v66, 0.0
  %v70 = vld [vmem:[%s3] sm:$0xff]
  %vm71 = vcmask 64512
  %v73 = vsel %vm71, %v68, 0
  %v76 = vsel %vm71, %v69, 0
  %78 = vmatpush.msra.mxu0 0.0
  %79 = vmatpush.msra.mxu0 0.0
  %80 = vmatpush.msra.mxu0 0.0
  %81 = vmatpush.msra.mxu0 0.0
  %82 = vmatpush.msra.mxu0 0.0
  %83 = vmatpush.msra.mxu0 0.0
  %84 = vmatpush.msra.mxu0 0.0
  %85 = vmatpush.msra.mxu0 0.0
  %86 = vmatpush.msra.mxu0 0.0
  %87 = vmatpush.msra.mxu0 0.0
  %88 = vmatpush.msra.mxu0 0.0
  %89 = vmatpush.msra.mxu0 0.0
  %90 = vmatpush.msra.mxu0 0.0
  %91 = vmatpush.msra.mxu0 0.0
  %92 = vmatpush.msra.mxu0 0.0
  %93 = vmatpush.msra.mxu0 %v70
  %94 = vmatmul.f32.gmra.mxu0 %v73
  %v95 = vpop.f32.mrf.mxu0
  %v96 = vadd.f32 0.0, %v95
  %97 = vmatmul.f32.gmra.mxu0 %v76
  %v98 = vpop.f32.mrf.mxu0
  %v99 = vadd.f32 0.0, %v98
  %100 = vdwg.mxu0
  %v101 = vld [vmem:[%s5] sm:$0xff]
  %v102 = vld [vmem:[%s5 + $0x8] sm:$0xff]
  %105 = vrot.lane.b32.xlu0 %v96, 120
  %v106 = vpop.permute.xlu0 %105
  %107 = vrot.lane.b32.xlu0 %v99, 120
  %v108 = vpop.permute.xlu0 %107
  %vm111 = vcmask 130048
  %v113 = vsel %vm111, %v101, 0
  %v116 = vsel %vm111, %v102, 0
  %118 = vmatpush.msra.mxu0 0.0
  %119 = vmatpush.msra.mxu0 0.0
  %120 = vmatpush.msra.mxu0 0.0
  %121 = vmatpush.msra.mxu0 0.0
  %122 = vmatpush.msra.mxu0 0.0
  %123 = vmatpush.msra.mxu0 0.0
  %124 = vmatpush.msra.mxu0 0.0
  %125 = vmatpush.msra.mxu0 0.0
  %126 = vmatpush.msra.mxu0 0.0
  %127 = vmatpush.msra.mxu0 0.0
  %128 = vmatpush.msra.mxu0 0.0
  %129 = vmatpush.msra.mxu0 0.0
  %130 = vmatpush.msra.mxu0 0.0
  %131 = vmatpush.msra.mxu0 0.0
  %132 = vmatpush.msra.mxu0 %v99
  %133 = vmatpush.msra.mxu0 %v96
  %134 = vmatmul.f32.gmra.mxu0 %v113
  %v135 = vpop.f32.mrf.mxu0
  %v136 = vadd.f32 %v106, %v135
  %137 = vmatmul.f32.gmra.mxu0 %v116
  %v138 = vpop.f32.mrf.mxu0
  %v139 = vadd.f32 %v108, %v138
  %140 = vdwg.mxu0
  %v141 = vld [vmem:[%s6] sm:$0xff]
  %v142 = vld [vmem:[%s6 + $0x8] sm:$0xff]
  %143 = vrot.lane.b32.xlu0 %v96, 112
  %v144 = vpop.permute.xlu0 %143
  %145 = vrot.lane.b32.xlu0 %v99, 112
  %v146 = vpop.permute.xlu0 %145
  %v150 = vsel %vm111, %v141, 0
  %v153 = vsel %vm111, %v142, 0
  %155 = vmatpush.msra.mxu0 0.0
  %156 = vmatpush.msra.mxu0 0.0
  %157 = vmatpush.msra.mxu0 0.0
  %158 = vmatpush.msra.mxu0 0.0
  %159 = vmatpush.msra.mxu0 0.0
  %160 = vmatpush.msra.mxu0 0.0
  %161 = vmatpush.msra.mxu0 0.0
  %162 = vmatpush.msra.mxu0 0.0
  %163 = vmatpush.msra.mxu0 0.0
  %164 = vmatpush.msra.mxu0 0.0
  %165 = vmatpush.msra.mxu0 0.0
  %166 = vmatpush.msra.mxu0 0.0
  %167 = vmatpush.msra.mxu0 0.0
  %168 = vmatpush.msra.mxu0 0.0
  %169 = vmatpush.msra.mxu0 %v146
  %170 = vmatpush.msra.mxu0 %v144
  %171 = vmatmul.f32.gmra.mxu0 %v150
  %v172 = vpop.f32.mrf.mxu0
  %v173 = vadd.f32 0.0, %v172
  %174 = vmatmul.f32.gmra.mxu0 %v153
  %v175 = vpop.f32.mrf.mxu0
  %v176 = vadd.f32 0.0, %v175
  %177 = vdwg.mxu0
  %v178 = vadd.f32 %v136, %v173
  %v179 = vadd.f32 %v139, %v176
  %v180 = vld [vmem:[%s4] sm:$0x1]
  %v182 = vperm.slane %v180, 0
  %v184 = vadd.f32 %v178, %v182
  %v185 = vadd.f32 %v179, %v182
  %188 = vrot.lane.b32.xlu0 %v63, 120
  %v189 = vpop.permute.xlu0 %188
  %190 = vrot.lane.b32.xlu0 %v66, 120
  %v191 = vpop.permute.xlu0 %190
  %v194 = vadd.f32 %v184, %v189
  %v195 = vadd.f32 %v185, %v191
  %v196 = vmax.f32 %v194, 0.0
  %v197 = vmax.f32 %v195, 0.0
  %198 = vst.msk [vmem:[%s7] sm:$0xff] %vm71, %v196
  %199 = vst.msk [vmem:[%s7 + $0x8] sm:$0xff] %vm71, %v197
  // Predicated region
  $region30: #{resnet_basic_block.1} parent=0 // pred_check
    _
  $region31: #{resnet_basic_block.1} parent=0 // pred_check_branch
    %201 = sbr.rel (0) target = $region33
  $region32: #{resnet_basic_block.1} parent=0 // pred_region
    _
  $region33: #{resnet_basic_block.1} parent=0 // pred_fallthru
    _
  // Predicated region
  $region34: #{resnet_basic_block.1} parent=0 // pred_check
    _
  $region35: #{resnet_basic_block.1} parent=0 // pred_check_branch
    %203 = sbr.rel (0) target = $region37
  $region36: #{resnet_basic_block.1} parent=0 // pred_region
    _
  $region37: #{resnet_basic_block.1} parent=0 // pred_fallthru
    _

</llo_original>
